<compile_context>
chip_gen: v7x
topology: tpu7x:2x2x1
jax: 0.10.0
libtpu: 0.0.40
codegen_flags: <defaults>
</compile_context>

<pallas_src>
import functools

import jax
import jax.numpy as jnp
from jax.experimental import pallas as pl
from jax.experimental.pallas import tpu as pltpu

# ----------------------------- config (small, deterministic) -----------------
B, S = 2, 8            # batch, seq_len
H = 32                 # hidden_size
INTER = 128            # intermediate_size (lane-dense contraction dim)
LN_EPS = 1e-12         # torch.nn.LayerNorm default


# ----------------------------- the Pallas kernel ------------------------------
def bert_output_kernel(hs_ref, res_ref, w_ref, seg_ref, p_ref, out_ref, *,
                       inv_h, eps):
    # hs_ref : (Mp, TPR*INTER)  hidden_states, TPR tokens packed per 128-lane row
    # res_ref: (Mp, 128)        residual (input_tensor), lane-dense
    # w_ref  : (TPR*INTER, 128) block-diagonal dense weight  kron(I_TPR, W)
    # seg_ref: (128, 128)       kron(I_TPR, ones(H,H)) -> segmented lane sums
    # p_ref  : (3, 128)         row0 = bias, row1 = gamma, row2 = beta (tiled TPRx)
    p = p_ref[...]
    bias, gamma, beta = p[0:1, :], p[1:2, :], p[2:3, :]

    # dense + bias + residual  (dropout == identity at inference)
    y = jnp.dot(hs_ref[...], w_ref[...], preferred_element_type=jnp.float32)
    y = y + bias + res_ref[...]

    # LayerNorm over each H-lane token segment (biased variance, like torch).
    # Segmented sums go through the MXU (tiny matmul), keeping the VPU path
    # purely lane-local and the store unmasked / lane-dense.
    seg = seg_ref[...]
    mean = jnp.dot(y, seg, preferred_element_type=jnp.float32) * inv_h
    d = y - mean
    var = jnp.dot(d * d, seg, preferred_element_type=jnp.float32) * inv_h
    out = d * jax.lax.rsqrt(var + eps) * gamma + beta

    out_ref[...] = out.astype(out_ref.dtype)


# ----------------------------- wrapper ----------------------------------------
def bert_output(hidden_states, input_tensor, w, b, gamma, beta):
    """hidden_states: (B, S, INTER); input_tensor: (B, S, H); w: (INTER, H) == torch W.T."""
    Bb, Ss, Ii = hidden_states.shape
    Hh = input_tensor.shape[-1]
    M = Bb * Ss

    # Toy-shape lane-dense packing path (H divides 128).
    assert 128 % Hh == 0 and Ii % 128 == 0, "toy path expects H | 128 and 128 | INTER"
    tpr = 128 // Hh                    # tokens per 128-lane row
    assert M % tpr == 0
    M2 = M // tpr                      # lane-dense rows
    M2p = ((M2 + 7) // 8) * 8          # pad rows to a sublane multiple

    hs2 = hidden_states.reshape(M2, tpr * Ii)       # 4 tokens' activations per row
    res2 = input_tensor.reshape(M2, tpr * Hh)       # 4 tokens' residuals per row
    if M2p != M2:
        hs2 = jnp.pad(hs2, ((0, M2p - M2), (0, 0)))
        res2 = jnp.pad(res2, ((0, M2p - M2), (0, 0)))

    # Block-diagonal weight so the matmul emits the lane-dense layout directly,
    # plus the segmented-sum matrix and the packed (3,128) parameter slab.
    w_bd = jnp.kron(jnp.eye(tpr, dtype=w.dtype), w)                           # (tpr*Ii, 128)
    seg = jnp.kron(jnp.eye(tpr, dtype=jnp.float32),
                   jnp.ones((Hh, Hh), jnp.float32))                           # (128, 128)
    pslab = jnp.stack([jnp.tile(b, tpr), jnp.tile(gamma, tpr),
                       jnp.tile(beta, tpr)], axis=0)                          # (3, 128)

    vmem = pl.BlockSpec(memory_space=pltpu.MemorySpace.VMEM)
    out2 = pl.pallas_call(
        functools.partial(bert_output_kernel, inv_h=1.0 / Hh, eps=LN_EPS),
        out_shape=jax.ShapeDtypeStruct((M2p, tpr * Hh), jnp.float32),
        in_specs=[vmem, vmem, vmem, vmem, vmem],
        out_specs=vmem,
    )(hs2, res2, w_bd, seg, pslab)

    return out2[:M2].reshape(Bb, Ss, Hh)


# ----------------------------- pure-JAX reference ------------------------------
def bert_output_ref(hidden_states, input_tensor, w, b, gamma, beta):
    y = hidden_states @ w + b + input_tensor
    mean = jnp.mean(y, axis=-1, keepdims=True)
    var = jnp.mean((y - mean) ** 2, axis=-1, keepdims=True)
    return (y - mean) * jax.lax.rsqrt(var + LN_EPS) * gamma + beta


# ----------------------------- main --------------------------------------------
if __name__ == "__main__":
    key = jax.random.PRNGKey(0)
    k_hs, k_res, k_w, k_b, k_g, k_be = jax.random.split(key, 6)

    hidden_states = jax.random.normal(k_hs, (B, S, INTER), dtype=jnp.float32)
    input_tensor = jax.random.normal(k_res, (B, S, H), dtype=jnp.float32)

    std = 0.02
    # Linear weight stored as (in, out) == torch W.T; bias / LN params as (H,).
    w = jax.random.normal(k_w, (INTER, H), jnp.float32) * std
    b = jax.random.normal(k_b, (H,), jnp.float32) * std
    gamma = 1.0 + jax.random.normal(k_g, (H,), jnp.float32) * std
    beta = jax.random.normal(k_be, (H,), jnp.float32) * std

    out = bert_output(hidden_states, input_tensor, w, b, gamma, beta)
    jax.block_until_ready(out)

    ref = bert_output_ref(hidden_states, input_tensor, w, b, gamma, beta)
    assert out.shape == (B, S, H)
    assert jnp.allclose(out, ref, atol=1e-4, rtol=1e-4), "BertOutput mismatch"

    print("KERNEL_OK")
</pallas_src>

<mosaic_0001>
module attributes {stable_mosaic.version = 11 : i64} {
  func.func @bert_output_kernel(%arg0: memref<8x512xf32, #tpu.memory_space<vmem>>, %arg1: memref<8x128xf32, #tpu.memory_space<vmem>>, %arg2: memref<512x128xf32, #tpu.memory_space<vmem>>, %arg3: memref<128x128xf32, #tpu.memory_space<vmem>>, %arg4: memref<3x128xf32, #tpu.memory_space<vmem>>, %arg5: memref<8x128xf32, #tpu.memory_space<vmem>>) attributes {dimension_semantics = [], scalar_prefetch = 0 : i64, scratch_operands = 0 : i64, tpu.core_type = #tpu.core_type<tc>} {
    %c0 = arith.constant 0 : index
    %c0_0 = arith.constant 0 : index
    %0 = vector.load %arg4[%c0, %c0_0] : memref<3x128xf32, #tpu.memory_space<vmem>>, vector<3x128xf32>
    %1 = vector.extract_strided_slice %0 {offsets = [0, 0], sizes = [1, 128], strides = [1, 1]} : vector<3x128xf32> to vector<1x128xf32>
    %2 = vector.extract_strided_slice %0 {offsets = [1, 0], sizes = [1, 128], strides = [1, 1]} : vector<3x128xf32> to vector<1x128xf32>
    %3 = vector.extract_strided_slice %0 {offsets = [2, 0], sizes = [1, 128], strides = [1, 1]} : vector<3x128xf32> to vector<1x128xf32>
    %c0_1 = arith.constant 0 : index
    %c0_2 = arith.constant 0 : index
    %4 = vector.load %arg0[%c0_1, %c0_2] : memref<8x512xf32, #tpu.memory_space<vmem>>, vector<8x512xf32>
    %c0_3 = arith.constant 0 : index
    %c0_4 = arith.constant 0 : index
    %5 = vector.load %arg2[%c0_3, %c0_4] : memref<512x128xf32, #tpu.memory_space<vmem>>, vector<512x128xf32>
    %cst = arith.constant dense<0.000000e+00> : vector<8x128xf32>
    %6 = tpu.matmul %4, %5, %cst {dimension_numbers = #tpu.dot_dimension_numbers<[1], [0], [0], [1], [0, 0, 1, 1], [], []>} : vector<8x512xf32>, vector<512x128xf32>, vector<8x128xf32> -> vector<8x128xf32>
    %7 = vector.broadcast %1 : vector<1x128xf32> to vector<8x128xf32>
    %8 = arith.addf %6, %7 : vector<8x128xf32>
    %c0_5 = arith.constant 0 : index
    %c0_6 = arith.constant 0 : index
    %9 = vector.load %arg1[%c0_5, %c0_6] : memref<8x128xf32, #tpu.memory_space<vmem>>, vector<8x128xf32>
    %10 = arith.addf %8, %9 : vector<8x128xf32>
    %c0_7 = arith.constant 0 : index
    %c0_8 = arith.constant 0 : index
    %11 = vector.load %arg3[%c0_7, %c0_8] : memref<128x128xf32, #tpu.memory_space<vmem>>, vector<128x128xf32>
    %cst_9 = arith.constant dense<0.000000e+00> : vector<8x128xf32>
    %12 = tpu.matmul %10, %11, %cst_9 {dimension_numbers = #tpu.dot_dimension_numbers<[1], [0], [0], [1], [0, 0, 1, 1], [], []>} : vector<8x128xf32>, vector<128x128xf32>, vector<8x128xf32> -> vector<8x128xf32>
    %cst_10 = arith.constant 3.125000e-02 : f32
    %13 = vector.broadcast %cst_10 : f32 to vector<8x128xf32>
    %14 = arith.mulf %12, %13 : vector<8x128xf32>
    %15 = arith.subf %10, %14 : vector<8x128xf32>
    %16 = arith.mulf %15, %15 : vector<8x128xf32>
    %cst_11 = arith.constant dense<0.000000e+00> : vector<8x128xf32>
    %17 = tpu.matmul %16, %11, %cst_11 {dimension_numbers = #tpu.dot_dimension_numbers<[1], [0], [0], [1], [0, 0, 1, 1], [], []>} : vector<8x128xf32>, vector<128x128xf32>, vector<8x128xf32> -> vector<8x128xf32>
    %cst_12 = arith.constant 3.125000e-02 : f32
    %18 = vector.broadcast %cst_12 : f32 to vector<8x128xf32>
    %19 = arith.mulf %17, %18 : vector<8x128xf32>
    %cst_13 = arith.constant 9.99999996E-13 : f32
    %20 = vector.broadcast %cst_13 : f32 to vector<8x128xf32>
    %21 = arith.addf %19, %20 : vector<8x128xf32>
    %22 = math.rsqrt %21 : vector<8x128xf32>
    %23 = arith.mulf %15, %22 : vector<8x128xf32>
    %24 = vector.broadcast %2 : vector<1x128xf32> to vector<8x128xf32>
    %25 = arith.mulf %23, %24 : vector<8x128xf32>
    %26 = vector.broadcast %3 : vector<1x128xf32> to vector<8x128xf32>
    %27 = arith.addf %25, %26 : vector<8x128xf32>
    %c0_14 = arith.constant 0 : index
    %c0_15 = arith.constant 0 : index
    %28 = vector.load %arg5[%c0_14, %c0_15] : memref<8x128xf32, #tpu.memory_space<vmem>>, vector<8x128xf32>
    tpu.vector_store %arg5[%c0_14, %c0_15], %27 {strides = array<i32>} : memref<8x128xf32, #tpu.memory_space<vmem>>, vector<8x128xf32>,
    return
  }
}

</mosaic_0001>

<llo_original>
// kernel: tpu_custom_call.1
$region0: #{tpu_custom_call.1}
  #allocation0 [shape = 'u32[]', space=smem, size = 0x4, offset = 0x4, fixed_abs, tag = 'smem constant byte address 0x4 - core index']
  #allocation1 [shape = 'u32[144,128]{1,0:T(1,128)}', space=vmem, size = 0x12000, scoped, tag = 'internal scratch']
  %s0 = inlined_call_operand.hbm [shape: f32[8,512], index: 0, kind: input, shape index: {}]
  %s1 = inlined_call_operand.hbm [shape: f32[8,128], index: 1, kind: input, shape index: {}]
  %s2 = inlined_call_operand.hbm [shape: f32[512,128], index: 2, kind: input, shape index: {}]
  %s3 = inlined_call_operand.hbm [shape: f32[128,128], index: 3, kind: input, shape index: {}]
  %s4 = inlined_call_operand.vmem [shape: f32[3,128], index: 4, kind: input, shape index: {}]
  %s5 = inlined_call_operand.hbm [shape: f32[8,128], index: 5, kind: output, shape index: {}]
  %s6 = sld [smem:[#allocation0]]
  $region46: #{tpu_custom_call.1} parent=0
    _
  %s8 = ssub.s32 1, %s6
  %s9 = scalar_select 0, %s8, %s6
  $region1: #{tpu_custom_call.1} parent=0
    #allocation2 [shape = 'u8[16384]{0}', space=vmem, size = 0x4000, scoped, tag = 'input window, operand 0, single buffered']
    #allocation3 [shape = 's32[1]{0}', space=sflag, size = 0x4, scoped, tag = 'scoped memory for tpu_custom_call.1']
    #allocation4 [shape = 's32[1]{0}', space=sflag, size = 0x4, scoped, tag = 'scoped memory for tpu_custom_call.1']
    #allocation5 [shape = 'u8[4096]{0}', space=vmem, size = 0x1000, scoped, tag = 'input window, operand 1, single buffered']
    #allocation6 [shape = 's32[1]{0}', space=sflag, size = 0x4, scoped, tag = 'scoped memory for tpu_custom_call.1']
    #allocation7 [shape = 'u8[262144]{0}', space=vmem, size = 0x40000, scoped, tag = 'input window, operand 2, single buffered']
    #allocation8 [shape = 'u8[65536]{0}', space=vmem, size = 0x10000, scoped, tag = 'input window, operand 3, single buffered']
    #allocation9 [shape = 's32[1]{0}', space=sflag, size = 0x4, scoped, tag = 'scoped memory for tpu_custom_call.1']
    #allocation10 [shape = 'u8[4096]{0}', space=vmem, size = 0x1000, scoped, tag = 'output window, operand 0, single buffered']
    %10 = vsyncpa [#allocation3], 0
    %11 = vsyncpa [#allocation6], 0
    %12 = vsyncpa [#allocation9], 0
    %13 = vsyncpa [#allocation4], 0
    // Predicated region
    $region2: #{tpu_custom_call.1} parent=1 // pred_check
      _
    $region3: #{tpu_custom_call.1} parent=1 // pred_check_branch
      %15 = sbr.rel (0) target = $region5
    $region4: #{tpu_custom_call.1} parent=1 // pred_region
      %s17 = ssub.s32 512, 512
      %18 = vsyncadd [#allocation3], %s17
      %s20 = sshll.u32 [#allocation2], 4
      %s21 = int_to_ptr.vmem [resolvable:$true] %s20
      %23 = dma.hbm_to_vmem [thread:$0]  %s0, 512, %s21, [#allocation3]
    $region5: #{tpu_custom_call.1} parent=1 // pred_fallthru
      _
    // Predicated region
    $region6: #{tpu_custom_call.1} parent=1 // pred_check
      _
    $region7: #{tpu_custom_call.1} parent=1 // pred_check_branch
      %25 = sbr.rel (0) target = $region9
    $region8: #{tpu_custom_call.1} parent=1 // pred_region
      %s27 = ssub.s32 128, 128
      %28 = vsyncadd [#allocation6], %s27
      %s30 = sshll.u32 [#allocation5], 4
      %s31 = int_to_ptr.vmem [resolvable:$true] %s30
      %33 = dma.hbm_to_vmem [thread:$0]  %s1, 128, %s31, [#allocation6]
    $region9: #{tpu_custom_call.1} parent=1 // pred_fallthru
      _
    // Predicated region
    $region10: #{tpu_custom_call.1} parent=1 // pred_check
      _
    $region11: #{tpu_custom_call.1} parent=1 // pred_check_branch
      %35 = sbr.rel (0) target = $region13
    $region12: #{tpu_custom_call.1} parent=1 // pred_region
      %s37 = ssub.s32 8192, 8192
      %38 = vsyncadd [#allocation6], %s37
      %s39 = sshll.u32 [#allocation7], 4
      %s40 = int_to_ptr.vmem [resolvable:$true] %s39
      %45 = dma.hbm_to_vmem [thread:$0]  %s2, 8192, %s40, [#allocation6], 128, 128, 8
    $region13: #{tpu_custom_call.1} parent=1 // pred_fallthru
      _
    // Predicated region
    $region14: #{tpu_custom_call.1} parent=1 // pred_check
      _
    $region15: #{tpu_custom_call.1} parent=1 // pred_check_branch
      %47 = sbr.rel (0) target = $region17
    $region16: #{tpu_custom_call.1} parent=1 // pred_region
      %s49 = ssub.s32 2048, 2048
      %50 = vsyncadd [#allocation9], %s49
      %s51 = sshll.u32 [#allocation8], 4
      %s52 = int_to_ptr.vmem [resolvable:$true] %s51
      %57 = dma.hbm_to_vmem [thread:$0]  %s3, 2048, %s52, [#allocation9], 128, 128, 8
    $region17: #{tpu_custom_call.1} parent=1 // pred_fallthru
      _
    // Predicated region
    $region18: #{tpu_custom_call.1} parent=1 // pred_check
      _
    $region19: #{tpu_custom_call.1} parent=1 // pred_check_branch
      %59 = sbr.rel (0) target = $region21
    $region20: #{tpu_custom_call.1} parent=1 // pred_region
      _
    $region21: #{tpu_custom_call.1} parent=1 // pred_fallthru
      _
    // Predicated region
    $region22: #{tpu_custom_call.1} parent=1 // pred_check
      _
    $region23: #{tpu_custom_call.1} parent=1 // pred_check_branch
      %61 = sbr.rel (0) target = $region25
    $region24: #{tpu_custom_call.1} parent=1 // pred_region
      %62 = dma.done [#allocation3], 512
    $region25: #{tpu_custom_call.1} parent=1 // pred_fallthru
      _
    // Predicated region
    $region26: #{tpu_custom_call.1} parent=1 // pred_check
      _
    $region27: #{tpu_custom_call.1} parent=1 // pred_check_branch
      %64 = sbr.rel (0) target = $region29
    $region28: #{tpu_custom_call.1} parent=1 // pred_region
      %65 = dma.done [#allocation6], 128
    $region29: #{tpu_custom_call.1} parent=1 // pred_fallthru
      _
    // Predicated region
    $region30: #{tpu_custom_call.1} parent=1 // pred_check
      _
    $region31: #{tpu_custom_call.1} parent=1 // pred_check_branch
      %67 = sbr.rel (0) target = $region33
    $region32: #{tpu_custom_call.1} parent=1 // pred_region
      %68 = dma.done [#allocation6], 8192
    $region33: #{tpu_custom_call.1} parent=1 // pred_fallthru
      _
    // Predicated region
    $region34: #{tpu_custom_call.1} parent=1 // pred_check
      _
    $region35: #{tpu_custom_call.1} parent=1 // pred_check_branch
      %70 = sbr.rel (0) target = $region37
    $region36: #{tpu_custom_call.1} parent=1 // pred_region
      %71 = dma.done [#allocation9], 2048
    $region37: #{tpu_custom_call.1} parent=1 // pred_fallthru
      _
    %v72 = vld [vmem:[%s4] sm:$0x7]
    %v73 = vld [vmem:[#allocation2] sm:$0xff]
    %v74 = vld [vmem:[#allocation2 + $0x8] sm:$0xff]
    %v75 = vld [vmem:[#allocation2 + $0x10] sm:$0xff]
    %v76 = vld [vmem:[#allocation2 + $0x18] sm:$0xff]
    %v77 = vld [vmem:[#allocation7] sm:$0xff]
    %v78 = vld [vmem:[#allocation7 + $0x8] sm:$0xff]
    %v79 = vld [vmem:[#allocation7 + $0x10] sm:$0xff]
    %v80 = vld [vmem:[#allocation7 + $0x18] sm:$0xff]
    %v81 = vld [vmem:[#allocation7 + $0x20] sm:$0xff]
    %v82 = vld [vmem:[#allocation7 + $0x28] sm:$0xff]
    %v83 = vld [vmem:[#allocation7 + $0x30] sm:$0xff]
    %v84 = vld [vmem:[#allocation7 + $0x38] sm:$0xff]
    %v85 = vld [vmem:[#allocation7 + $0x40] sm:$0xff]
    %v86 = vld [vmem:[#allocation7 + $0x48] sm:$0xff]
    %v87 = vld [vmem:[#allocation7 + $0x50] sm:$0xff]
    %v88 = vld [vmem:[#allocation7 + $0x58] sm:$0xff]
    %v89 = vld [vmem:[#allocation7 + $0x60] sm:$0xff]
    %v90 = vld [vmem:[#allocation7 + $0x68] sm:$0xff]
    %v91 = vld [vmem:[#allocation7 + $0x70] sm:$0xff]
    %v92 = vld [vmem:[#allocation7 + $0x78] sm:$0xff]
    %v93 = vld [vmem:[#allocation7 + $0x80] sm:$0xff]
    %v94 = vld [vmem:[#allocation7 + $0x88] sm:$0xff]
    %v95 = vld [vmem:[#allocation7 + $0x90] sm:$0xff]
    %v96 = vld [vmem:[#allocation7 + $0x98] sm:$0xff]
    %v97 = vld [vmem:[#allocation7 + $0xa0] sm:$0xff]
    %v98 = vld [vmem:[#allocation7 + $0xa8] sm:$0xff]
    %v99 = vld [vmem:[#allocation7 + $0xb0] sm:$0xff]
    %v100 = vld [vmem:[#allocation7 + $0xb8] sm:$0xff]
    %v101 = vld [vmem:[#allocation7 + $0xc0] sm:$0xff]
    %v102 = vld [vmem:[#allocation7 + $0xc8] sm:$0xff]
    %v103 = vld [vmem:[#allocation7 + $0xd0] sm:$0xff]
    %v104 = vld [vmem:[#allocation7 + $0xd8] sm:$0xff]
    %v105 = vld [vmem:[#allocation7 + $0xe0] sm:$0xff]
    %v106 = vld [vmem:[#allocation7 + $0xe8] sm:$0xff]
    %v107 = vld [vmem:[#allocation7 + $0xf0] sm:$0xff]
    %v108 = vld [vmem:[#allocation7 + $0xf8] sm:$0xff]
    %v109 = vld [vmem:[#allocation7 + $0x100] sm:$0xff]
    %v110 = vld [vmem:[#allocation7 + $0x108] sm:$0xff]
    %v111 = vld [vmem:[#allocation7 + $0x110] sm:$0xff]
    %v112 = vld [vmem:[#allocation7 + $0x118] sm:$0xff]
    %v113 = vld [vmem:[#allocation7 + $0x120] sm:$0xff]
    %v114 = vld [vmem:[#allocation7 + $0x128] sm:$0xff]
    %v115 = vld [vmem:[#allocation7 + $0x130] sm:$0xff]
    %v116 = vld [vmem:[#allocation7 + $0x138] sm:$0xff]
    %v117 = vld [vmem:[#allocation7 + $0x140] sm:$0xff]
    %v118 = vld [vmem:[#allocation7 + $0x148] sm:$0xff]
    %v119 = vld [vmem:[#allocation7 + $0x150] sm:$0xff]
    %v120 = vld [vmem:[#allocation7 + $0x158] sm:$0xff]
    %v121 = vld [vmem:[#allocation7 + $0x160] sm:$0xff]
    %v122 = vld [vmem:[#allocation7 + $0x168] sm:$0xff]
    %v123 = vld [vmem:[#allocation7 + $0x170] sm:$0xff]
    %v124 = vld [vmem:[#allocation7 + $0x178] sm:$0xff]
    %v125 = vld [vmem:[#allocation7 + $0x180] sm:$0xff]
    %v126 = vld [vmem:[#allocation7 + $0x188] sm:$0xff]
    %v127 = vld [vmem:[#allocation7 + $0x190] sm:$0xff]
    %v128 = vld [vmem:[#allocation7 + $0x198] sm:$0xff]
    %v129 = vld [vmem:[#allocation7 + $0x1a0] sm:$0xff]
    %v130 = vld [vmem:[#allocation7 + $0x1a8] sm:$0xff]
    %v131 = vld [vmem:[#allocation7 + $0x1b0] sm:$0xff]
    %v132 = vld [vmem:[#allocation7 + $0x1b8] sm:$0xff]
    %v133 = vld [vmem:[#allocation7 + $0x1c0] sm:$0xff]
    %v134 = vld [vmem:[#allocation7 + $0x1c8] sm:$0xff]
    %v135 = vld [vmem:[#allocation7 + $0x1d0] sm:$0xff]
    %v136 = vld [vmem:[#allocation7 + $0x1d8] sm:$0xff]
    %v137 = vld [vmem:[#allocation7 + $0x1e0] sm:$0xff]
    %v138 = vld [vmem:[#allocation7 + $0x1e8] sm:$0xff]
    %v139 = vld [vmem:[#allocation7 + $0x1f0] sm:$0xff]
    %v140 = vld [vmem:[#allocation7 + $0x1f8] sm:$0xff]
    %v141 = vlaneseq
    %v142 = vshrl.u32 %v141, 7
    %v143 = vsub.s32 0, %v142
    %v144 = vrot.slane %v72, %v143
    %145 = vmatprep.subr.mxu0 0.0
    %146 = vmatpush1.msra.mxu0 %v77
    %147 = vmatprep.subr.mxu0 0.0
    %148 = vmatpush1.msra.mxu0 %v78
    %149 = vmatprep.subr.mxu0 0.0
    %150 = vmatpush1.msra.mxu0 %v79
    %151 = vmatprep.subr.mxu0 0.0
    %152 = vmatpush1.msra.mxu0 %v80
    %153 = vmatprep.subr.mxu0 0.0
    %154 = vmatpush1.msra.mxu0 %v81
    %155 = vmatprep.subr.mxu0 0.0
    %156 = vmatpush1.msra.mxu0 %v82
    %157 = vmatprep.subr.mxu0 0.0
    %158 = vmatpush1.msra.mxu0 %v83
    %159 = vmatprep.subr.mxu0 0.0
    %160 = vmatpush1.msra.mxu0 %v84
    %161 = vmatprep.subr.mxu0 0.0
    %162 = vmatpush1.msra.mxu0 %v85
    %163 = vmatprep.subr.mxu0 0.0
    %164 = vmatpush1.msra.mxu0 %v86
    %165 = vmatprep.subr.mxu0 0.0
    %166 = vmatpush1.msra.mxu0 %v87
    %167 = vmatprep.subr.mxu0 0.0
    %168 = vmatpush1.msra.mxu0 %v88
    %169 = vmatprep.subr.mxu0 0.0
    %170 = vmatpush1.msra.mxu0 %v89
    %171 = vmatprep.subr.mxu0 0.0
    %172 = vmatpush1.msra.mxu0 %v90
    %173 = vmatprep.subr.mxu0 0.0
    %174 = vmatpush1.msra.mxu0 %v91
    %175 = vmatprep.subr.mxu0 0.0
    %176 = vmatpush1.msra.mxu0 %v92
    %177 = vmatprep.subr.mxu0 0.0
    %178 = vmatpush1.msra.mxu0 %v93
    %179 = vmatprep.subr.mxu0 0.0
    %180 = vmatpush1.msra.mxu0 %v94
    %181 = vmatprep.subr.mxu0 0.0
    %182 = vmatpush1.msra.mxu0 %v95
    %183 = vmatprep.subr.mxu0 0.0
    %184 = vmatpush1.msra.mxu0 %v96
    %185 = vmatprep.subr.mxu0 0.0
    %186 = vmatpush1.msra.mxu0 %v97
    %187 = vmatprep.subr.mxu0 0.0
    %188 = vmatpush1.msra.mxu0 %v98
    %189 = vmatprep.subr.mxu0 0.0
    %190 = vmatpush1.msra.mxu0 %v99
    %191 = vmatprep.subr.mxu0 0.0
    %192 = vmatpush1.msra.mxu0 %v100
    %193 = vmatprep.subr.mxu0 0.0
    %194 = vmatpush1.msra.mxu0 %v101
    %195 = vmatprep.subr.mxu0 0.0
    %196 = vmatpush1.msra.mxu0 %v102
    %197 = vmatprep.subr.mxu0 0.0
    %198 = vmatpush1.msra.mxu0 %v103
    %199 = vmatprep.subr.mxu0 0.0
    %200 = vmatpush1.msra.mxu0 %v104
    %201 = vmatprep.subr.mxu0 0.0
    %202 = vmatpush1.msra.mxu0 %v105
    %203 = vmatprep.subr.mxu0 0.0
    %204 = vmatpush1.msra.mxu0 %v106
    %205 = vmatprep.subr.mxu0 0.0
    %206 = vmatpush1.msra.mxu0 %v107
    %207 = vmatprep.subr.mxu0 0.0
    %208 = vmatpush1.msra.mxu0 %v108
    %209 = vmatprep.mubr.f32.mxu0 %v74
    %210 = vmatmul.mubr.f32.gmra.mrb[0].mxu0 %v73
    %v211 = vpop.f32.mrb[0].mxu0
    %v212 = vadd.f32 %v144, %v211
    %v213 = vpop.f32.mrb[0].mxu0
    %214 = vdwg.mxu0
    %215 = vmatprep.subr.mxu0 0.0
    %216 = vmatpush1.msra.mxu0 %v109
    %217 = vmatprep.subr.mxu0 0.0
    %218 = vmatpush1.msra.mxu0 %v110
    %219 = vmatprep.subr.mxu0 0.0
    %220 = vmatpush1.msra.mxu0 %v111
    %221 = vmatprep.subr.mxu0 0.0
    %222 = vmatpush1.msra.mxu0 %v112
    %223 = vmatprep.subr.mxu0 0.0
    %224 = vmatpush1.msra.mxu0 %v113
    %225 = vmatprep.subr.mxu0 0.0
    %226 = vmatpush1.msra.mxu0 %v114
    %227 = vmatprep.subr.mxu0 0.0
    %228 = vmatpush1.msra.mxu0 %v115
    %229 = vmatprep.subr.mxu0 0.0
    %230 = vmatpush1.msra.mxu0 %v116
    %231 = vmatprep.subr.mxu0 0.0
    %232 = vmatpush1.msra.mxu0 %v117
    %233 = vmatprep.subr.mxu0 0.0
    %234 = vmatpush1.msra.mxu0 %v118
    %235 = vmatprep.subr.mxu0 0.0
    %236 = vmatpush1.msra.mxu0 %v119
    %237 = vmatprep.subr.mxu0 0.0
    %238 = vmatpush1.msra.mxu0 %v120
    %239 = vmatprep.subr.mxu0 0.0
    %240 = vmatpush1.msra.mxu0 %v121
    %241 = vmatprep.subr.mxu0 0.0
    %242 = vmatpush1.msra.mxu0 %v122
    %243 = vmatprep.subr.mxu0 0.0
    %244 = vmatpush1.msra.mxu0 %v123
    %245 = vmatprep.subr.mxu0 0.0
    %246 = vmatpush1.msra.mxu0 %v124
    %247 = vmatprep.subr.mxu0 0.0
    %248 = vmatpush1.msra.mxu0 %v125
    %249 = vmatprep.subr.mxu0 0.0
    %250 = vmatpush1.msra.mxu0 %v126
    %251 = vmatprep.subr.mxu0 0.0
    %252 = vmatpush1.msra.mxu0 %v127
    %253 = vmatprep.subr.mxu0 0.0
    %254 = vmatpush1.msra.mxu0 %v128
    %255 = vmatprep.subr.mxu0 0.0
    %256 = vmatpush1.msra.mxu0 %v129
    %257 = vmatprep.subr.mxu0 0.0
    %258 = vmatpush1.msra.mxu0 %v130
    %259 = vmatprep.subr.mxu0 0.0
    %260 = vmatpush1.msra.mxu0 %v131
    %261 = vmatprep.subr.mxu0 0.0
    %262 = vmatpush1.msra.mxu0 %v132
    %263 = vmatprep.subr.mxu0 0.0
    %264 = vmatpush1.msra.mxu0 %v133
    %265 = vmatprep.subr.mxu0 0.0
    %266 = vmatpush1.msra.mxu0 %v134
    %267 = vmatprep.subr.mxu0 0.0
    %268 = vmatpush1.msra.mxu0 %v135
    %269 = vmatprep.subr.mxu0 0.0
    %270 = vmatpush1.msra.mxu0 %v136
    %271 = vmatprep.subr.mxu0 0.0
    %272 = vmatpush1.msra.mxu0 %v137
    %273 = vmatprep.subr.mxu0 0.0
    %274 = vmatpush1.msra.mxu0 %v138
    %275 = vmatprep.subr.mxu0 0.0
    %276 = vmatpush1.msra.mxu0 %v139
    %277 = vmatprep.subr.mxu0 0.0
    %278 = vmatpush1.msra.mxu0 %v140
    %279 = vmatprep.mubr.f32.mxu0 %v76
    %280 = vmatmul.mubr.f32.gmra.mrb[0].mxu0 %v75
    %v281 = vpop.f32.mrb[0].mxu0
    %v282 = vadd.f32 %v212, %v281
    %v283 = vpop.f32.mrb[0].mxu0
    %284 = vdwg.mxu0
    %v285 = vld [vmem:[#allocation5] sm:$0xff]
    %v286 = vadd.f32 %v282, %v285
    %v287 = vld [vmem:[#allocation8] sm:$0xff]
    %v288 = vld [vmem:[#allocation8 + $0x8] sm:$0xff]
    %v289 = vld [vmem:[#allocation8 + $0x10] sm:$0xff]
    %v290 = vld [vmem:[#allocation8 + $0x18] sm:$0xff]
    %v291 = vld [vmem:[#allocation8 + $0x20] sm:$0xff]
    %v292 = vld [vmem:[#allocation8 + $0x28] sm:$0xff]
    %v293 = vld [vmem:[#allocation8 + $0x30] sm:$0xff]
    %v294 = vld [vmem:[#allocation8 + $0x38] sm:$0xff]
    %v295 = vld [vmem:[#allocation8 + $0x40] sm:$0xff]
    %v296 = vld [vmem:[#allocation8 + $0x48] sm:$0xff]
    %v297 = vld [vmem:[#allocation8 + $0x50] sm:$0xff]
    %v298 = vld [vmem:[#allocation8 + $0x58] sm:$0xff]
    %v299 = vld [vmem:[#allocation8 + $0x60] sm:$0xff]
    %v300 = vld [vmem:[#allocation8 + $0x68] sm:$0xff]
    %v301 = vld [vmem:[#allocation8 + $0x70] sm:$0xff]
    %v302 = vld [vmem:[#allocation8 + $0x78] sm:$0xff]
    %303 = vmatprep.subr.mxu0 0.0
    %304 = vmatpush1.msra.mxu0 %v287
    %305 = vmatprep.subr.mxu0 0.0
    %306 = vmatpush1.msra.mxu0 %v288
    %307 = vmatprep.subr.mxu0 0.0
    %308 = vmatpush1.msra.mxu0 %v289
    %309 = vmatprep.subr.mxu0 0.0
    %310 = vmatpush1.msra.mxu0 %v290
    %311 = vmatprep.subr.mxu0 0.0
    %312 = vmatpush1.msra.mxu0 %v291
    %313 = vmatprep.subr.mxu0 0.0
    %314 = vmatpush1.msra.mxu0 %v292
    %315 = vmatprep.subr.mxu0 0.0
    %316 = vmatpush1.msra.mxu0 %v293
    %317 = vmatprep.subr.mxu0 0.0
    %318 = vmatpush1.msra.mxu0 %v294
    %319 = vmatprep.subr.mxu0 0.0
    %320 = vmatpush1.msra.mxu0 %v295
    %321 = vmatprep.subr.mxu0 0.0
    %322 = vmatpush1.msra.mxu0 %v296
    %323 = vmatprep.subr.mxu0 0.0
    %324 = vmatpush1.msra.mxu0 %v297
    %325 = vmatprep.subr.mxu0 0.0
    %326 = vmatpush1.msra.mxu0 %v298
    %327 = vmatprep.subr.mxu0 0.0
    %328 = vmatpush1.msra.mxu0 %v299
    %329 = vmatprep.subr.mxu0 0.0
    %330 = vmatpush1.msra.mxu0 %v300
    %331 = vmatprep.subr.mxu0 0.0
    %332 = vmatpush1.msra.mxu0 %v301
    %333 = vmatprep.subr.mxu0 0.0
    %334 = vmatpush1.msra.mxu0 %v302
    %335 = vmatprep.subr.mxu0 0.0
    %336 = vmatpush1.msra.mxu0 0.0
    %337 = vmatprep.subr.mxu0 0.0
    %338 = vmatpush1.msra.mxu0 0.0
    %339 = vmatprep.subr.mxu0 0.0
    %340 = vmatpush1.msra.mxu0 0.0
    %341 = vmatprep.subr.mxu0 0.0
    %342 = vmatpush1.msra.mxu0 0.0
    %343 = vmatprep.subr.mxu0 0.0
    %344 = vmatpush1.msra.mxu0 0.0
    %345 = vmatprep.subr.mxu0 0.0
    %346 = vmatpush1.msra.mxu0 0.0
    %347 = vmatprep.subr.mxu0 0.0
    %348 = vmatpush1.msra.mxu0 0.0
    %349 = vmatprep.subr.mxu0 0.0
    %350 = vmatpush1.msra.mxu0 0.0
    %351 = vmatprep.subr.mxu0 0.0
    %352 = vmatpush1.msra.mxu0 0.0
    %353 = vmatprep.subr.mxu0 0.0
    %354 = vmatpush1.msra.mxu0 0.0
    %355 = vmatprep.subr.mxu0 0.0
    %356 = vmatpush1.msra.mxu0 0.0
    %357 = vmatprep.subr.mxu0 0.0
    %358 = vmatpush1.msra.mxu0 0.0
    %359 = vmatprep.subr.mxu0 0.0
    %360 = vmatpush1.msra.mxu0 0.0
    %361 = vmatprep.subr.mxu0 0.0
    %362 = vmatpush1.msra.mxu0 0.0
    %363 = vmatprep.subr.mxu0 0.0
    %364 = vmatpush1.msra.mxu0 0.0
    %365 = vmatprep.subr.mxu0 0.0
    %366 = vmatpush1.msra.mxu0 0.0
    %367 = vmatprep.mubr.f32.mxu0 0.0
    %368 = vmatmul.mubr.f32.gmra.mrb[0].mxu0 %v286
    %v369 = vpop.f32.mrb[0].mxu0
    %v370 = vadd.f32 0.0, %v369
    %v371 = vpop.f32.mrb[0].mxu0
    %372 = vdwg.mxu0
    %v373 = vmul.f32 %v370, 0.03125
    %v374 = vsub.f32 %v286, %v373
    %v375 = vmul.f32 %v374, %v374
    %376 = vmatprep.subr.mxu0 0.0
    %377 = vmatpush1.msra.mxu0 %v287
    %378 = vmatprep.subr.mxu0 0.0
    %379 = vmatpush1.msra.mxu0 %v288
    %380 = vmatprep.subr.mxu0 0.0
    %381 = vmatpush1.msra.mxu0 %v289
    %382 = vmatprep.subr.mxu0 0.0
    %383 = vmatpush1.msra.mxu0 %v290
    %384 = vmatprep.subr.mxu0 0.0
    %385 = vmatpush1.msra.mxu0 %v291
    %386 = vmatprep.subr.mxu0 0.0
    %387 = vmatpush1.msra.mxu0 %v292
    %388 = vmatprep.subr.mxu0 0.0
    %389 = vmatpush1.msra.mxu0 %v293
    %390 = vmatprep.subr.mxu0 0.0
    %391 = vmatpush1.msra.mxu0 %v294
    %392 = vmatprep.subr.mxu0 0.0
    %393 = vmatpush1.msra.mxu0 %v295
    %394 = vmatprep.subr.mxu0 0.0
    %395 = vmatpush1.msra.mxu0 %v296
    %396 = vmatprep.subr.mxu0 0.0
    %397 = vmatpush1.msra.mxu0 %v297
    %398 = vmatprep.subr.mxu0 0.0
    %399 = vmatpush1.msra.mxu0 %v298
    %400 = vmatprep.subr.mxu0 0.0
    %401 = vmatpush1.msra.mxu0 %v299
    %402 = vmatprep.subr.mxu0 0.0
    %403 = vmatpush1.msra.mxu0 %v300
    %404 = vmatprep.subr.mxu0 0.0
    %405 = vmatpush1.msra.mxu0 %v301
    %406 = vmatprep.subr.mxu0 0.0
    %407 = vmatpush1.msra.mxu0 %v302
    %408 = vmatprep.subr.mxu0 0.0
    %409 = vmatpush1.msra.mxu0 0.0
    %410 = vmatprep.subr.mxu0 0.0
    %411 = vmatpush1.msra.mxu0 0.0
    %412 = vmatprep.subr.mxu0 0.0
    %413 = vmatpush1.msra.mxu0 0.0
    %414 = vmatprep.subr.mxu0 0.0
    %415 = vmatpush1.msra.mxu0 0.0
    %416 = vmatprep.subr.mxu0 0.0
    %417 = vmatpush1.msra.mxu0 0.0
    %418 = vmatprep.subr.mxu0 0.0
    %419 = vmatpush1.msra.mxu0 0.0
    %420 = vmatprep.subr.mxu0 0.0
    %421 = vmatpush1.msra.mxu0 0.0
    %422 = vmatprep.subr.mxu0 0.0
    %423 = vmatpush1.msra.mxu0 0.0
    %424 = vmatprep.subr.mxu0 0.0
    %425 = vmatpush1.msra.mxu0 0.0
    %426 = vmatprep.subr.mxu0 0.0
    %427 = vmatpush1.msra.mxu0 0.0
    %428 = vmatprep.subr.mxu0 0.0
    %429 = vmatpush1.msra.mxu0 0.0
    %430 = vmatprep.subr.mxu0 0.0
    %431 = vmatpush1.msra.mxu0 0.0
    %432 = vmatprep.subr.mxu0 0.0
    %433 = vmatpush1.msra.mxu0 0.0
    %434 = vmatprep.subr.mxu0 0.0
    %435 = vmatpush1.msra.mxu0 0.0
    %436 = vmatprep.subr.mxu0 0.0
    %437 = vmatpush1.msra.mxu0 0.0
    %438 = vmatprep.subr.mxu0 0.0
    %439 = vmatpush1.msra.mxu0 0.0
    %440 = vmatprep.mubr.f32.mxu0 0.0
    %441 = vmatmul.mubr.f32.gmra.mrb[0].mxu0 %v375
    %v442 = vpop.f32.mrb[0].mxu0
    %v443 = vadd.f32 0.0, %v442
    %v444 = vpop.f32.mrb[0].mxu0
    %445 = vdwg.mxu0
    %v446 = vmul.f32 %v443, 0.03125
    %v447 = vadd.f32 %v446, 1e-12
    %v448 = vrsqrt.pop %v447
    %v449 = vmul.f32 %v374, %v448
    %v450 = vlaneseq
    %v451 = vshrl.u32 %v450, 7
    %v452 = vsub.s32 1, %v451
    %v453 = vrot.slane %v72, %v452
    %v454 = vmul.f32 %v449, %v453
    %v455 = vlaneseq
    %v456 = vshrl.u32 %v455, 7
    %v457 = vsub.s32 2, %v456
    %v458 = vrot.slane %v72, %v457
    %v459 = vadd.f32 %v454, %v458
    %460 = vst [vmem:[#allocation10] sm:$0xff] %v459
    // Predicated region
    $region38: #{tpu_custom_call.1} parent=1 // pred_check
      _
    $region39: #{tpu_custom_call.1} parent=1 // pred_check_branch
      %462 = sbr.rel (0) target = $region41
    $region40: #{tpu_custom_call.1} parent=1 // pred_region
      %s464 = ssub.s32 128, 128
      %465 = vsyncadd [#allocation4], %s464
      %s467 = sshll.u32 [#allocation10], 4
      %s468 = int_to_ptr.vmem [resolvable:$true] %s467
      %470 = dma.vmem_to_hbm [thread:$0]  %s468, 128, %s5, [#allocation4]
    $region41: #{tpu_custom_call.1} parent=1 // pred_fallthru
      _
    // Predicated region
    $region42: #{tpu_custom_call.1} parent=1 // pred_check
      _
    $region43: #{tpu_custom_call.1} parent=1 // pred_check_branch
      %472 = sbr.rel (0) target = $region45
    $region44: #{tpu_custom_call.1} parent=1 // pred_region
      %473 = dma.done [#allocation4], 128
    $region45: #{tpu_custom_call.1} parent=1 // pred_fallthru
      _
    %474 = vsyncpa [#allocation3], 1
    %475 = vsyncpa [#allocation6], 1
    %476 = vsyncpa [#allocation9], 1
    %477 = vsyncpa [#allocation4], 1

</llo_original>
